<compile_context>
chip_gen: v7x
topology: tpu7x:2x2x1
jax: 0.10.0
libtpu: 0.0.40
codegen_flags: <defaults>
</compile_context>

<pallas_src>
import jax
import jax.numpy as jnp
from jax import lax
from jax.experimental import pallas as pl
from jax.experimental.pallas import tpu as pltpu

VOCAB_SIZE = 100
EMBED_DIM = 32
HIDDEN_DIM = 32
NUM_LAYERS = 1          # single layer; inter-layer dropout is identity in eval mode
NUM_CLASSES = 4
SUBLANES = 8            # pad batch to full sublane occupancy
LANE_PAD = 128          # lane-dense classifier output width (sliced to C in wrapper)


def lstm_classifier_kernel(ids_ref,        # (T*Bp, 1)   int32  time-major flat token ids
                           emb_gates_ref,  # (Vp, 8H)    bf16   embedding @ [W_ih_f.T | W_ih_b.T]
                           b_in_ref,       # (1, 8H)     f32    combined (b_ih + b_hh) biases
                           whhT_f_ref,     # (H, 4H)     bf16   forward recurrent weight (transposed)
                           wcT_ref,        # (2H, 128)   bf16   classifier [fwd ; bwd], lane-padded
                           bc_ref,         # (1, 128)    f32
                           out_ref,        # (Bp, 128)   f32
                           gates_ref):     # (T*Bp, 8H)  f32    VMEM scratch: hoisted projections
    H = whhT_f_ref.shape[0]
    Bp = out_ref.shape[0]
    TB = gates_ref.shape[0]
    T = TB // Bp
    Vp = emb_gates_ref.shape[0]

    # ---- Fused embedding gather + input projection for BOTH directions, one MXU matmul:
    #      gates = one_hot(ids) @ (embedding @ W_in) + b.  Exact selection of the precomputed
    #      bf16 rows (one-hot is exact), f32 accumulate.
    #      TODO(synk): for large vocab sizes switch to a scalar-prefetch / DMA row gather.
    ids = ids_ref[...]                                              # (T*Bp, 1) int32
    vocab_iota = lax.broadcasted_iota(jnp.int32, (TB, Vp), 1)
    onehot = jnp.where(vocab_iota == ids, 1.0, 0.0).astype(jnp.bfloat16)
    gates_ref[...] = (
        jnp.dot(onehot, emb_gates_ref[...], preferred_element_type=jnp.float32)
        + b_in_ref[...])

    # ---- Backward direction FIRST: it depends only on gates_ref, so placed before the forward
    #      loop it can be scheduled under the recurrence's per-step MXU latency.
    #      lstm_out[:, -1, H:] is the reverse cell after exactly ONE step on x[T-1] from zero
    #      state: the recurrent term and the forget-gate*c0 term vanish, so no backward time loop
    #      and no W_hh_b.  NOTE: valid only because the classifier reads lstm_out[:, -1, :].
    gb = gates_ref[pl.ds((T - 1) * Bp, Bp), 4 * H:8 * H]
    sigb = jax.nn.sigmoid(gb)
    thb = jnp.tanh(gb)
    c_b = sigb[:, 0:H] * thb[:, 2 * H:3 * H]                        # i_b * g_b   (c0 == 0)
    h_b = sigb[:, 3 * H:4 * H] * jnp.tanh(c_b)                      # o_b * tanh(c_b)

    whhT_f = whhT_f_ref[...]                                        # bf16, hoisted out of the loop

    # ---- Forward recurrence.  h/c live in the fori_loop carry (vregs); the per-step recurrent
    #      dot is a single-pass bf16 MXU op (h cast at the dot, f32 accumulate); elementwise
    #      state math stays f32.
    def body(t, carry):
        h, c = carry
        row = pl.multiple_of(t * Bp, Bp)
        gates = (gates_ref[pl.ds(row, Bp), 0:4 * H]
                 + jnp.dot(h.astype(jnp.bfloat16), whhT_f,
                           preferred_element_type=jnp.float32))
        sig = jax.nn.sigmoid(gates)        # full-width (Bp, 4H) EUP call
        th = jnp.tanh(gates)               # full-width (Bp, 4H) EUP call
        i = sig[:, 0 * H:1 * H]
        f = sig[:, 1 * H:2 * H]
        g = th[:, 2 * H:3 * H]
        o = sig[:, 3 * H:4 * H]
        c_new = f * c + i * g
        h_new = o * jnp.tanh(c_new)
        return h_new, c_new

    h0 = jnp.zeros((Bp, H), jnp.float32)
    c0 = jnp.zeros((Bp, H), jnp.float32)
    h_f, _ = lax.fori_loop(0, T, body, (h0, c0), unroll=True)       # T is static -> full unroll

    # ---- Classifier on concat(h_fwd[T-1], h_bwd[T-1]); dropout is identity in eval mode.
    #      Single fused dot on the lane-padded (2H, 128) weight (sliced to C outside).
    h_cat = jnp.concatenate([h_f, h_b], axis=1).astype(jnp.bfloat16)   # (Bp, 2H)
    logits = (jnp.dot(h_cat, wcT_ref[...], preferred_element_type=jnp.float32)
              + bc_ref[...])
    out_ref[...] = logits.astype(out_ref.dtype)


def init_params(key, vocab_size=VOCAB_SIZE, E=EMBED_DIM, H=HIDDEN_DIM, C=NUM_CLASSES):
    ks = jax.random.split(key, 11)
    s_lstm = 1.0 / float(jnp.sqrt(H))
    s_cls = 1.0 / float(jnp.sqrt(2 * H))

    def u(k, shape, scale):
        return jax.random.uniform(k, shape, jnp.float32, -scale, scale)

    return dict(
        embedding=jax.random.normal(ks[0], (vocab_size, E), jnp.float32),
        # forward direction
        w_ih_f=u(ks[1], (4 * H, E), s_lstm),
        w_hh_f=u(ks[2], (4 * H, H), s_lstm),
        b_ih_f=u(ks[3], (4 * H,), s_lstm),
        b_hh_f=u(ks[4], (4 * H,), s_lstm),
        # backward direction
        w_ih_b=u(ks[5], (4 * H, E), s_lstm),
        w_hh_b=u(ks[6], (4 * H, H), s_lstm),   # kept for parity with PyTorch; unused by the output
        b_ih_b=u(ks[7], (4 * H,), s_lstm),
        b_hh_b=u(ks[8], (4 * H,), s_lstm),
        # classifier
        w_cls=u(ks[9], (C, 2 * H), s_cls),
        b_cls=u(ks[10], (C,), s_cls),
    )


@jax.jit
def lstm_classifier_forward(token_ids, params):
    B, T = token_ids.shape
    V, E = params["embedding"].shape
    H = params["w_hh_f"].shape[1]
    C = params["w_cls"].shape[0]
    Bp = max(SUBLANES, -(-B // SUBLANES) * SUBLANES)      # pad batch to a multiple of 8 sublanes
    Vp = max(LANE_PAD, -(-V // LANE_PAD) * LANE_PAD)      # lane-dense one-hot width

    # Tiny int32 id tensor (time-major, batch inner) -- the heavy activation glue now lives
    # inside the kernel as the one-hot MXU gather.
    ids = jnp.pad(token_ids.T.astype(jnp.int32), ((0, 0), (0, Bp - B)))    # (T, Bp)
    ids = ids.reshape(T * Bp, 1)

    # Parameter-only prep (no activation-sized HBM traffic):
    # fused embedding + input-projection weight for BOTH directions, f32 product rounded once
    # to bf16, vocab padded to Vp rows of zeros.
    w_in = jnp.concatenate([params["w_ih_f"].T, params["w_ih_b"].T], axis=1)   # (E, 8H) f32
    emb_gates = jnp.dot(params["embedding"], w_in)                             # (V, 8H) f32
    emb_gates = jnp.pad(emb_gates, ((0, Vp - V), (0, 0))).astype(jnp.bfloat16)  # (Vp, 8H) bf16
    b_in = jnp.concatenate([params["b_ih_f"] + params["b_hh_f"],
                            params["b_ih_b"] + params["b_hh_b"]]).reshape(1, 8 * H)

    whhT_f = params["w_hh_f"].T.astype(jnp.bfloat16)       # (H, 4H) single-pass bf16 recurrent dot
                                                           # W_hh_b never affects lstm_out[:, -1, :]
    wcT = jnp.pad(params["w_cls"].T,
                  ((0, 0), (0, LANE_PAD - C))).astype(jnp.bfloat16)            # (2H, 128)
    bc = jnp.pad(params["b_cls"], (0, LANE_PAD - C)).reshape(1, LANE_PAD)

    # Single grid-less invocation: everything fits VMEM at these sizes.
    # For large B/T: grid over batch tiles ("parallel", v7x dual-TC) and stream the hoisted
    # projection over time chunks ("arbitrary") with h/c kept in scratch across grid steps.
    vmem = pl.BlockSpec(memory_space=pltpu.MemorySpace.VMEM)
    out = pl.pallas_call(
        lstm_classifier_kernel,
        out_shape=jax.ShapeDtypeStruct((Bp, LANE_PAD), jnp.float32),
        in_specs=[vmem] * 6,
        out_specs=vmem,
        scratch_shapes=[pltpu.VMEM((T * Bp, 8 * H), jnp.float32)],  # hoisted gate projections
    )(ids, emb_gates, b_in, whhT_f, wcT, bc)
    return out[:B, :C]


if __name__ == "__main__":
    key = jax.random.PRNGKey(0)
    pkey, dkey = jax.random.split(key)
    params = init_params(pkey)

    B, T = 2, 8
    token_ids = jax.random.randint(dkey, (B, T), 0, VOCAB_SIZE, dtype=jnp.int32)

    logits = lstm_classifier_forward(token_ids, params)
    jax.block_until_ready(logits)
    assert logits.shape == (B, NUM_CLASSES)
    print("KERNEL_OK")
</pallas_src>

<mosaic_0001>
module attributes {stable_mosaic.version = 11 : i64} {
  func.func @lstm_classifier_kernel(%arg0: memref<64x1xi32, #tpu.memory_space<vmem>>, %arg1: memref<128x256xbf16, #tpu.memory_space<vmem>>, %arg2: memref<1x256xf32, #tpu.memory_space<vmem>>, %arg3: memref<32x128xbf16, #tpu.memory_space<vmem>>, %arg4: memref<64x128xbf16, #tpu.memory_space<vmem>>, %arg5: memref<1x128xf32, #tpu.memory_space<vmem>>, %arg6: memref<8x128xf32, #tpu.memory_space<vmem>>, %arg7: memref<64x256xf32, #tpu.memory_space<vmem>>) attributes {dimension_semantics = [], scalar_prefetch = 0 : i64, scratch_operands = 1 : i64, tpu.core_type = #tpu.core_type<tc>} {
    %c0 = arith.constant 0 : index
    %c0_0 = arith.constant 0 : index
    %0 = vector.load %arg0[%c0, %c0_0] : memref<64x1xi32, #tpu.memory_space<vmem>>, vector<64x1xi32>
    %1 = tpu.iota {dimensions = array<i32: 1>} : vector<64x128xi32>
    %2 = vector.broadcast %0 : vector<64x1xi32> to vector<64x128xi32>
    %3 = arith.cmpi eq, %1, %2 : vector<64x128xi32>
    %cst = arith.constant 1.000000e+00 : f32
    %cst_1 = arith.constant 0.000000e+00 : f32
    %4 = vector.broadcast %cst : f32 to vector<64x128xf32>
    %5 = vector.broadcast %cst_1 : f32 to vector<64x128xf32>
    %6 = arith.select %3, %4, %5 : vector<64x128xi1>, vector<64x128xf32>
    %7 = arith.truncf %6 : vector<64x128xf32> to vector<64x128xbf16>
    %c0_2 = arith.constant 0 : index
    %c0_3 = arith.constant 0 : index
    %8 = vector.load %arg1[%c0_2, %c0_3] : memref<128x256xbf16, #tpu.memory_space<vmem>>, vector<128x256xbf16>
    %cst_4 = arith.constant dense<0.000000e+00> : vector<64x256xf32>
    %9 = tpu.matmul %7, %8, %cst_4 {dimension_numbers = #tpu.dot_dimension_numbers<[1], [0], [0], [1], [0, 0, 1, 1], [], []>} : vector<64x128xbf16>, vector<128x256xbf16>, vector<64x256xf32> -> vector<64x256xf32>
    %c0_5 = arith.constant 0 : index
    %c0_6 = arith.constant 0 : index
    %10 = vector.load %arg2[%c0_5, %c0_6] : memref<1x256xf32, #tpu.memory_space<vmem>>, vector<1x256xf32>
    %11 = vector.broadcast %10 : vector<1x256xf32> to vector<64x256xf32>
    %12 = arith.addf %9, %11 : vector<64x256xf32>
    %c0_7 = arith.constant 0 : index
    %c0_8 = arith.constant 0 : index
    %13 = vector.load %arg7[%c0_7, %c0_8] : memref<64x256xf32, #tpu.memory_space<vmem>>, vector<64x256xf32>
    tpu.vector_store %arg7[%c0_7, %c0_8], %12 {strides = array<i32>} : memref<64x256xf32, #tpu.memory_space<vmem>>, vector<64x256xf32>,
    %c56 = arith.constant 56 : index
    %c128 = arith.constant 128 : index
    %14 = vector.load %arg7[%c56, %c128] : memref<64x256xf32, #tpu.memory_space<vmem>>, vector<8x128xf32>
    %15 = arith.negf %14 : vector<8x128xf32>
    %16 = math.exp %15 : vector<8x128xf32>
    %cst_9 = arith.constant 1.000000e+00 : f32
    %17 = vector.broadcast %cst_9 : f32 to vector<8x128xf32>
    %18 = arith.addf %17, %16 : vector<8x128xf32>
    %19 = arith.divf %17, %18 : vector<8x128xf32>
    %20 = math.tanh %14 : vector<8x128xf32>
    %21 = vector.extract_strided_slice %19 {offsets = [0, 0], sizes = [8, 32], strides = [1, 1]} : vector<8x128xf32> to vector<8x32xf32>
    %22 = vector.extract_strided_slice %20 {offsets = [0, 64], sizes = [8, 32], strides = [1, 1]} : vector<8x128xf32> to vector<8x32xf32>
    %23 = arith.mulf %21, %22 : vector<8x32xf32>
    %24 = vector.extract_strided_slice %19 {offsets = [0, 96], sizes = [8, 32], strides = [1, 1]} : vector<8x128xf32> to vector<8x32xf32>
    %25 = math.tanh %23 : vector<8x32xf32>
    %26 = arith.mulf %24, %25 : vector<8x32xf32>
    %c0_10 = arith.constant 0 : index
    %c0_11 = arith.constant 0 : index
    %27 = vector.load %arg3[%c0_10, %c0_11] : memref<32x128xbf16, #tpu.memory_space<vmem>>, vector<32x128xbf16>
    %cst_12 = arith.constant 0.000000e+00 : f32
    %28 = vector.broadcast %cst_12 : f32 to vector<8x32xf32>
    %cst_13 = arith.constant 0.000000e+00 : f32
    %29 = vector.broadcast %cst_13 : f32 to vector<8x32xf32>
    %c0_i32 = arith.constant 0 : i32
    %c8_i32 = arith.constant 8 : i32
    %30 = arith.muli %c0_i32, %c8_i32 : i32
    %31 = tpu.assume_multiple %30, 8 : i32
    %32 = arith.index_cast %31 : i32 to index
    %c0_14 = arith.constant 0 : index
    %33 = vector.load %arg7[%32, %c0_14] : memref<64x256xf32, #tpu.memory_space<vmem>>, vector<8x128xf32>
    %34 = arith.truncf %28 : vector<8x32xf32> to vector<8x32xbf16>
    %cst_15 = arith.constant dense<0.000000e+00> : vector<8x128xf32>
    %35 = tpu.matmul %34, %27, %cst_15 {dimension_numbers = #tpu.dot_dimension_numbers<[1], [0], [0], [1], [0, 0, 1, 1], [], []>} : vector<8x32xbf16>, vector<32x128xbf16>, vector<8x128xf32> -> vector<8x128xf32>
    %36 = arith.addf %33, %35 : vector<8x128xf32>
    %37 = arith.negf %36 : vector<8x128xf32>
    %38 = math.exp %37 : vector<8x128xf32>
    %cst_16 = arith.constant 1.000000e+00 : f32
    %39 = vector.broadcast %cst_16 : f32 to vector<8x128xf32>
    %40 = arith.addf %39, %38 : vector<8x128xf32>
    %41 = arith.divf %39, %40 : vector<8x128xf32>
    %42 = math.tanh %36 : vector<8x128xf32>
    %43 = vector.extract_strided_slice %41 {offsets = [0, 0], sizes = [8, 32], strides = [1, 1]} : vector<8x128xf32> to vector<8x32xf32>
    %44 = vector.extract_strided_slice %41 {offsets = [0, 32], sizes = [8, 32], strides = [1, 1]} : vector<8x128xf32> to vector<8x32xf32>
    %45 = vector.extract_strided_slice %42 {offsets = [0, 64], sizes = [8, 32], strides = [1, 1]} : vector<8x128xf32> to vector<8x32xf32>
    %46 = vector.extract_strided_slice %41 {offsets = [0, 96], sizes = [8, 32], strides = [1, 1]} : vector<8x128xf32> to vector<8x32xf32>
    %47 = arith.mulf %44, %29 : vector<8x32xf32>
    %48 = arith.mulf %43, %45 : vector<8x32xf32>
    %49 = arith.addf %47, %48 : vector<8x32xf32>
    %50 = math.tanh %49 : vector<8x32xf32>
    %51 = arith.mulf %46, %50 : vector<8x32xf32>
    %c1_i32 = arith.constant 1 : i32
    %c8_i32_17 = arith.constant 8 : i32
    %52 = arith.muli %c1_i32, %c8_i32_17 : i32
    %53 = tpu.assume_multiple %52, 8 : i32
    %54 = arith.index_cast %53 : i32 to index
    %c0_18 = arith.constant 0 : index
    %55 = vector.load %arg7[%54, %c0_18] : memref<64x256xf32, #tpu.memory_space<vmem>>, vector<8x128xf32>
    %56 = arith.truncf %51 : vector<8x32xf32> to vector<8x32xbf16>
    %cst_19 = arith.constant dense<0.000000e+00> : vector<8x128xf32>
    %57 = tpu.matmul %56, %27, %cst_19 {dimension_numbers = #tpu.dot_dimension_numbers<[1], [0], [0], [1], [0, 0, 1, 1], [], []>} : vector<8x32xbf16>, vector<32x128xbf16>, vector<8x128xf32> -> vector<8x128xf32>
    %58 = arith.addf %55, %57 : vector<8x128xf32>
    %59 = arith.negf %58 : vector<8x128xf32>
    %60 = math.exp %59 : vector<8x128xf32>
    %cst_20 = arith.constant 1.000000e+00 : f32
    %61 = vector.broadcast %cst_20 : f32 to vector<8x128xf32>
    %62 = arith.addf %61, %60 : vector<8x128xf32>
    %63 = arith.divf %61, %62 : vector<8x128xf32>
    %64 = math.tanh %58 : vector<8x128xf32>
    %65 = vector.extract_strided_slice %63 {offsets = [0, 0], sizes = [8, 32], strides = [1, 1]} : vector<8x128xf32> to vector<8x32xf32>
    %66 = vector.extract_strided_slice %63 {offsets = [0, 32], sizes = [8, 32], strides = [1, 1]} : vector<8x128xf32> to vector<8x32xf32>
    %67 = vector.extract_strided_slice %64 {offsets = [0, 64], sizes = [8, 32], strides = [1, 1]} : vector<8x128xf32> to vector<8x32xf32>
    %68 = vector.extract_strided_slice %63 {offsets = [0, 96], sizes = [8, 32], strides = [1, 1]} : vector<8x128xf32> to vector<8x32xf32>
    %69 = arith.mulf %66, %49 : vector<8x32xf32>
    %70 = arith.mulf %65, %67 : vector<8x32xf32>
    %71 = arith.addf %69, %70 : vector<8x32xf32>
    %72 = math.tanh %71 : vector<8x32xf32>
    %73 = arith.mulf %68, %72 : vector<8x32xf32>
    %c2_i32 = arith.constant 2 : i32
    %c8_i32_21 = arith.constant 8 : i32
    %74 = arith.muli %c2_i32, %c8_i32_21 : i32
    %75 = tpu.assume_multiple %74, 8 : i32
    %76 = arith.index_cast %75 : i32 to index
    %c0_22 = arith.constant 0 : index
    %77 = vector.load %arg7[%76, %c0_22] : memref<64x256xf32, #tpu.memory_space<vmem>>, vector<8x128xf32>
    %78 = arith.truncf %73 : vector<8x32xf32> to vector<8x32xbf16>
    %cst_23 = arith.constant dense<0.000000e+00> : vector<8x128xf32>
    %79 = tpu.matmul %78, %27, %cst_23 {dimension_numbers = #tpu.dot_dimension_numbers<[1], [0], [0], [1], [0, 0, 1, 1], [], []>} : vector<8x32xbf16>, vector<32x128xbf16>, vector<8x128xf32> -> vector<8x128xf32>
    %80 = arith.addf %77, %79 : vector<8x128xf32>
    %81 = arith.negf %80 : vector<8x128xf32>
    %82 = math.exp %81 : vector<8x128xf32>
    %cst_24 = arith.constant 1.000000e+00 : f32
    %83 = vector.broadcast %cst_24 : f32 to vector<8x128xf32>
    %84 = arith.addf %83, %82 : vector<8x128xf32>
    %85 = arith.divf %83, %84 : vector<8x128xf32>
    %86 = math.tanh %80 : vector<8x128xf32>
    %87 = vector.extract_strided_slice %85 {offsets = [0, 0], sizes = [8, 32], strides = [1, 1]} : vector<8x128xf32> to vector<8x32xf32>
    %88 = vector.extract_strided_slice %85 {offsets = [0, 32], sizes = [8, 32], strides = [1, 1]} : vector<8x128xf32> to vector<8x32xf32>
    %89 = vector.extract_strided_slice %86 {offsets = [0, 64], sizes = [8, 32], strides = [1, 1]} : vector<8x128xf32> to vector<8x32xf32>
    %90 = vector.extract_strided_slice %85 {offsets = [0, 96], sizes = [8, 32], strides = [1, 1]} : vector<8x128xf32> to vector<8x32xf32>
    %91 = arith.mulf %88, %71 : vector<8x32xf32>
    %92 = arith.mulf %87, %89 : vector<8x32xf32>
    %93 = arith.addf %91, %92 : vector<8x32xf32>
    %94 = math.tanh %93 : vector<8x32xf32>
    %95 = arith.mulf %90, %94 : vector<8x32xf32>
    %c3_i32 = arith.constant 3 : i32
    %c8_i32_25 = arith.constant 8 : i32
    %96 = arith.muli %c3_i32, %c8_i32_25 : i32
    %97 = tpu.assume_multiple %96, 8 : i32
    %98 = arith.index_cast %97 : i32 to index
    %c0_26 = arith.constant 0 : index
    %99 = vector.load %arg7[%98, %c0_26] : memref<64x256xf32, #tpu.memory_space<vmem>>, vector<8x128xf32>
    %100 = arith.truncf %95 : vector<8x32xf32> to vector<8x32xbf16>
    %cst_27 = arith.constant dense<0.000000e+00> : vector<8x128xf32>
    %101 = tpu.matmul %100, %27, %cst_27 {dimension_numbers = #tpu.dot_dimension_numbers<[1], [0], [0], [1], [0, 0, 1, 1], [], []>} : vector<8x32xbf16>, vector<32x128xbf16>, vector<8x128xf32> -> vector<8x128xf32>
    %102 = arith.addf %99, %101 : vector<8x128xf32>
    %103 = arith.negf %102 : vector<8x128xf32>
    %104 = math.exp %103 : vector<8x128xf32>
    %cst_28 = arith.constant 1.000000e+00 : f32
    %105 = vector.broadcast %cst_28 : f32 to vector<8x128xf32>
    %106 = arith.addf %105, %104 : vector<8x128xf32>
    %107 = arith.divf %105, %106 : vector<8x128xf32>
    %108 = math.tanh %102 : vector<8x128xf32>
    %109 = vector.extract_strided_slice %107 {offsets = [0, 0], sizes = [8, 32], strides = [1, 1]} : vector<8x128xf32> to vector<8x32xf32>
    %110 = vector.extract_strided_slice %107 {offsets = [0, 32], sizes = [8, 32], strides = [1, 1]} : vector<8x128xf32> to vector<8x32xf32>
    %111 = vector.extract_strided_slice %108 {offsets = [0, 64], sizes = [8, 32], strides = [1, 1]} : vector<8x128xf32> to vector<8x32xf32>
    %112 = vector.extract_strided_slice %107 {offsets = [0, 96], sizes = [8, 32], strides = [1, 1]} : vector<8x128xf32> to vector<8x32xf32>
    %113 = arith.mulf %110, %93 : vector<8x32xf32>
    %114 = arith.mulf %109, %111 : vector<8x32xf32>
    %115 = arith.addf %113, %114 : vector<8x32xf32>
    %116 = math.tanh %115 : vector<8x32xf32>
    %117 = arith.mulf %112, %116 : vector<8x32xf32>
    %c4_i32 = arith.constant 4 : i32
    %c8_i32_29 = arith.constant 8 : i32
    %118 = arith.muli %c4_i32, %c8_i32_29 : i32
    %119 = tpu.assume_multiple %118, 8 : i32
    %120 = arith.index_cast %119 : i32 to index
    %c0_30 = arith.constant 0 : index
    %121 = vector.load %arg7[%120, %c0_30] : memref<64x256xf32, #tpu.memory_space<vmem>>, vector<8x128xf32>
    %122 = arith.truncf %117 : vector<8x32xf32> to vector<8x32xbf16>
    %cst_31 = arith.constant dense<0.000000e+00> : vector<8x128xf32>
    %123 = tpu.matmul %122, %27, %cst_31 {dimension_numbers = #tpu.dot_dimension_numbers<[1], [0], [0], [1], [0, 0, 1, 1], [], []>} : vector<8x32xbf16>, vector<32x128xbf16>, vector<8x128xf32> -> vector<8x128xf32>
    %124 = arith.addf %121, %123 : vector<8x128xf32>
    %125 = arith.negf %124 : vector<8x128xf32>
    %126 = math.exp %125 : vector<8x128xf32>
    %cst_32 = arith.constant 1.000000e+00 : f32
    %127 = vector.broadcast %cst_32 : f32 to vector<8x128xf32>
    %128 = arith.addf %127, %126 : vector<8x128xf32>
    %129 = arith.divf %127, %128 : vector<8x128xf32>
    %130 = math.tanh %124 : vector<8x128xf32>
    %131 = vector.extract_strided_slice %129 {offsets = [0, 0], sizes = [8, 32], strides = [1, 1]} : vector<8x128xf32> to vector<8x32xf32>
    %132 = vector.extract_strided_slice %129 {offsets = [0, 32], sizes = [8, 32], strides = [1, 1]} : vector<8x128xf32> to vector<8x32xf32>
    %133 = vector.extract_strided_slice %130 {offsets = [0, 64], sizes = [8, 32], strides = [1, 1]} : vector<8x128xf32> to vector<8x32xf32>
    %134 = vector.extract_strided_slice %129 {offsets = [0, 96], sizes = [8, 32], strides = [1, 1]} : vector<8x128xf32> to vector<8x32xf32>
    %135 = arith.mulf %132, %115 : vector<8x32xf32>
    %136 = arith.mulf %131, %133 : vector<8x32xf32>
    %137 = arith.addf %135, %136 : vector<8x32xf32>
    %138 = math.tanh %137 : vector<8x32xf32>
    %139 = arith.mulf %134, %138 : vector<8x32xf32>
    %c5_i32 = arith.constant 5 : i32
    %c8_i32_33 = arith.constant 8 : i32
    %140 = arith.muli %c5_i32, %c8_i32_33 : i32
    %141 = tpu.assume_multiple %140, 8 : i32
    %142 = arith.index_cast %141 : i32 to index
    %c0_34 = arith.constant 0 : index
    %143 = vector.load %arg7[%142, %c0_34] : memref<64x256xf32, #tpu.memory_space<vmem>>, vector<8x128xf32>
    %144 = arith.truncf %139 : vector<8x32xf32> to vector<8x32xbf16>
    %cst_35 = arith.constant dense<0.000000e+00> : vector<8x128xf32>
    %145 = tpu.matmul %144, %27, %cst_35 {dimension_numbers = #tpu.dot_dimension_numbers<[1], [0], [0], [1], [0, 0, 1, 1], [], []>} : vector<8x32xbf16>, vector<32x128xbf16>, vector<8x128xf32> -> vector<8x128xf32>
    %146 = arith.addf %143, %145 : vector<8x128xf32>
    %147 = arith.negf %146 : vector<8x128xf32>
    %148 = math.exp %147 : vector<8x128xf32>
    %cst_36 = arith.constant 1.000000e+00 : f32
    %149 = vector.broadcast %cst_36 : f32 to vector<8x128xf32>
    %150 = arith.addf %149, %148 : vector<8x128xf32>
    %151 = arith.divf %149, %150 : vector<8x128xf32>
    %152 = math.tanh %146 : vector<8x128xf32>
    %153 = vector.extract_strided_slice %151 {offsets = [0, 0], sizes = [8, 32], strides = [1, 1]} : vector<8x128xf32> to vector<8x32xf32>
    %154 = vector.extract_strided_slice %151 {offsets = [0, 32], sizes = [8, 32], strides = [1, 1]} : vector<8x128xf32> to vector<8x32xf32>
    %155 = vector.extract_strided_slice %152 {offsets = [0, 64], sizes = [8, 32], strides = [1, 1]} : vector<8x128xf32> to vector<8x32xf32>
    %156 = vector.extract_strided_slice %151 {offsets = [0, 96], sizes = [8, 32], strides = [1, 1]} : vector<8x128xf32> to vector<8x32xf32>
    %157 = arith.mulf %154, %137 : vector<8x32xf32>
    %158 = arith.mulf %153, %155 : vector<8x32xf32>
    %159 = arith.addf %157, %158 : vector<8x32xf32>
    %160 = math.tanh %159 : vector<8x32xf32>
    %161 = arith.mulf %156, %160 : vector<8x32xf32>
    %c6_i32 = arith.constant 6 : i32
    %c8_i32_37 = arith.constant 8 : i32
    %162 = arith.muli %c6_i32, %c8_i32_37 : i32
    %163 = tpu.assume_multiple %162, 8 : i32
    %164 = arith.index_cast %163 : i32 to index
    %c0_38 = arith.constant 0 : index
    %165 = vector.load %arg7[%164, %c0_38] : memref<64x256xf32, #tpu.memory_space<vmem>>, vector<8x128xf32>
    %166 = arith.truncf %161 : vector<8x32xf32> to vector<8x32xbf16>
    %cst_39 = arith.constant dense<0.000000e+00> : vector<8x128xf32>
    %167 = tpu.matmul %166, %27, %cst_39 {dimension_numbers = #tpu.dot_dimension_numbers<[1], [0], [0], [1], [0, 0, 1, 1], [], []>} : vector<8x32xbf16>, vector<32x128xbf16>, vector<8x128xf32> -> vector<8x128xf32>
    %168 = arith.addf %165, %167 : vector<8x128xf32>
    %169 = arith.negf %168 : vector<8x128xf32>
    %170 = math.exp %169 : vector<8x128xf32>
    %cst_40 = arith.constant 1.000000e+00 : f32
    %171 = vector.broadcast %cst_40 : f32 to vector<8x128xf32>
    %172 = arith.addf %171, %170 : vector<8x128xf32>
    %173 = arith.divf %171, %172 : vector<8x128xf32>
    %174 = math.tanh %168 : vector<8x128xf32>
    %175 = vector.extract_strided_slice %173 {offsets = [0, 0], sizes = [8, 32], strides = [1, 1]} : vector<8x128xf32> to vector<8x32xf32>
    %176 = vector.extract_strided_slice %173 {offsets = [0, 32], sizes = [8, 32], strides = [1, 1]} : vector<8x128xf32> to vector<8x32xf32>
    %177 = vector.extract_strided_slice %174 {offsets = [0, 64], sizes = [8, 32], strides = [1, 1]} : vector<8x128xf32> to vector<8x32xf32>
    %178 = vector.extract_strided_slice %173 {offsets = [0, 96], sizes = [8, 32], strides = [1, 1]} : vector<8x128xf32> to vector<8x32xf32>
    %179 = arith.mulf %176, %159 : vector<8x32xf32>
    %180 = arith.mulf %175, %177 : vector<8x32xf32>
    %181 = arith.addf %179, %180 : vector<8x32xf32>
    %182 = math.tanh %181 : vector<8x32xf32>
    %183 = arith.mulf %178, %182 : vector<8x32xf32>
    %c7_i32 = arith.constant 7 : i32
    %c8_i32_41 = arith.constant 8 : i32
    %184 = arith.muli %c7_i32, %c8_i32_41 : i32
    %185 = tpu.assume_multiple %184, 8 : i32
    %186 = arith.index_cast %185 : i32 to index
    %c0_42 = arith.constant 0 : index
    %187 = vector.load %arg7[%186, %c0_42] : memref<64x256xf32, #tpu.memory_space<vmem>>, vector<8x128xf32>
    %188 = arith.truncf %183 : vector<8x32xf32> to vector<8x32xbf16>
    %cst_43 = arith.constant dense<0.000000e+00> : vector<8x128xf32>
    %189 = tpu.matmul %188, %27, %cst_43 {dimension_numbers = #tpu.dot_dimension_numbers<[1], [0], [0], [1], [0, 0, 1, 1], [], []>} : vector<8x32xbf16>, vector<32x128xbf16>, vector<8x128xf32> -> vector<8x128xf32>
    %190 = arith.addf %187, %189 : vector<8x128xf32>
    %191 = arith.negf %190 : vector<8x128xf32>
    %192 = math.exp %191 : vector<8x128xf32>
    %cst_44 = arith.constant 1.000000e+00 : f32
    %193 = vector.broadcast %cst_44 : f32 to vector<8x128xf32>
    %194 = arith.addf %193, %192 : vector<8x128xf32>
    %195 = arith.divf %193, %194 : vector<8x128xf32>
    %196 = math.tanh %190 : vector<8x128xf32>
    %197 = vector.extract_strided_slice %195 {offsets = [0, 0], sizes = [8, 32], strides = [1, 1]} : vector<8x128xf32> to vector<8x32xf32>
    %198 = vector.extract_strided_slice %195 {offsets = [0, 32], sizes = [8, 32], strides = [1, 1]} : vector<8x128xf32> to vector<8x32xf32>
    %199 = vector.extract_strided_slice %196 {offsets = [0, 64], sizes = [8, 32], strides = [1, 1]} : vector<8x128xf32> to vector<8x32xf32>
    %200 = vector.extract_strided_slice %195 {offsets = [0, 96], sizes = [8, 32], strides = [1, 1]} : vector<8x128xf32> to vector<8x32xf32>
    %201 = arith.mulf %198, %181 : vector<8x32xf32>
    %202 = arith.mulf %197, %199 : vector<8x32xf32>
    %203 = arith.addf %201, %202 : vector<8x32xf32>
    %204 = math.tanh %203 : vector<8x32xf32>
    %205 = arith.mulf %200, %204 : vector<8x32xf32>
    %c8_i32_45 = arith.constant 8 : i32
    %206 = tpu.concatenate %205, %26 in 1 : vector<8x32xf32>, vector<8x32xf32> -> vector<8x64xf32>
    %207 = arith.truncf %206 : vector<8x64xf32> to vector<8x64xbf16>
    %c0_46 = arith.constant 0 : index
    %c0_47 = arith.constant 0 : index
    %208 = vector.load %arg4[%c0_46, %c0_47] : memref<64x128xbf16, #tpu.memory_space<vmem>>, vector<64x128xbf16>
    %cst_48 = arith.constant dense<0.000000e+00> : vector<8x128xf32>
    %209 = tpu.matmul %207, %208, %cst_48 {dimension_numbers = #tpu.dot_dimension_numbers<[1], [0], [0], [1], [0, 0, 1, 1], [], []>} : vector<8x64xbf16>, vector<64x128xbf16>, vector<8x128xf32> -> vector<8x128xf32>
    %c0_49 = arith.constant 0 : index
    %c0_50 = arith.constant 0 : index
    %210 = vector.load %arg5[%c0_49, %c0_50] : memref<1x128xf32, #tpu.memory_space<vmem>>, vector<1x128xf32>
    %211 = vector.broadcast %210 : vector<1x128xf32> to vector<8x128xf32>
    %212 = arith.addf %209, %211 : vector<8x128xf32>
    %c0_51 = arith.constant 0 : index
    %c0_52 = arith.constant 0 : index
    %213 = vector.load %arg6[%c0_51, %c0_52] : memref<8x128xf32, #tpu.memory_space<vmem>>, vector<8x128xf32>
    tpu.vector_store %arg6[%c0_51, %c0_52], %212 {strides = array<i32>} : memref<8x128xf32, #tpu.memory_space<vmem>>, vector<8x128xf32>,
    return
  }
}

</mosaic_0001>

<llo_original>
// kernel: lstm_classifier_forward.1
$region0: #{lstm_classifier_forward.1}
  #allocation0 [shape = 'u32[]', space=smem, size = 0x4, offset = 0x4, fixed_abs, tag = 'smem constant byte address 0x4 - core index']
  #allocation1 [shape = 'u32[144,128]{1,0:T(1,128)}', space=vmem, size = 0x12000, scoped, tag = 'internal scratch']
  #allocation2 [shape = 'f32[64,256]{1,0:T(8,128)}', space=vmem, size = 0x10000, scoped, tag = 'scratch operand']
  %s0 = inlined_call_operand.vmem [shape: s32[64,1], index: 0, kind: input, shape index: {}]
  %s1 = inlined_call_operand.vmem [shape: bf16[128,256], index: 1, kind: input, shape index: {}]
  %s2 = inlined_call_operand.vmem [shape: f32[1,256], index: 2, kind: input, shape index: {}]
  %s3 = inlined_call_operand.vmem [shape: bf16[32,128], index: 3, kind: input, shape index: {}]
  %s4 = inlined_call_operand.vmem [shape: bf16[64,128], index: 4, kind: input, shape index: {}]
  %s5 = inlined_call_operand.vmem [shape: f32[1,128], index: 5, kind: input, shape index: {}]
  %s6 = inlined_call_operand.vmem [shape: f32[8,128], index: 6, kind: output, shape index: {}]
  %s7 = sld [smem:[#allocation0]]
  $region34: #{lstm_classifier_forward.1} parent=0
    _
  %s9 = ssub.s32 1, %s7
  %s10 = scalar_select 0, %s9, %s7
  // Predicated region
  $region2: #{lstm_classifier_forward.1} parent=0 // pred_check
    _
  $region3: #{lstm_classifier_forward.1} parent=0 // pred_check_branch
    %12 = sbr.rel (0) target = $region5
  $region4: #{lstm_classifier_forward.1} parent=0 // pred_region
    _
  $region5: #{lstm_classifier_forward.1} parent=0 // pred_fallthru
    _
  // Predicated region
  $region6: #{lstm_classifier_forward.1} parent=0 // pred_check
    _
  $region7: #{lstm_classifier_forward.1} parent=0 // pred_check_branch
    %14 = sbr.rel (0) target = $region9
  $region8: #{lstm_classifier_forward.1} parent=0 // pred_region
    _
  $region9: #{lstm_classifier_forward.1} parent=0 // pred_fallthru
    _
  // Predicated region
  $region10: #{lstm_classifier_forward.1} parent=0 // pred_check
    _
  $region11: #{lstm_classifier_forward.1} parent=0 // pred_check_branch
    %16 = sbr.rel (0) target = $region13
  $region12: #{lstm_classifier_forward.1} parent=0 // pred_region
    _
  $region13: #{lstm_classifier_forward.1} parent=0 // pred_fallthru
    _
  // Predicated region
  $region14: #{lstm_classifier_forward.1} parent=0 // pred_check
    _
  $region15: #{lstm_classifier_forward.1} parent=0 // pred_check_branch
    %18 = sbr.rel (0) target = $region17
  $region16: #{lstm_classifier_forward.1} parent=0 // pred_region
    _
  $region17: #{lstm_classifier_forward.1} parent=0 // pred_fallthru
    _
  // Predicated region
  $region18: #{lstm_classifier_forward.1} parent=0 // pred_check
    _
  $region19: #{lstm_classifier_forward.1} parent=0 // pred_check_branch
    %20 = sbr.rel (0) target = $region21
  $region20: #{lstm_classifier_forward.1} parent=0 // pred_region
    _
  $region21: #{lstm_classifier_forward.1} parent=0 // pred_fallthru
    _
  // Predicated region
  $region22: #{lstm_classifier_forward.1} parent=0 // pred_check
    _
  $region23: #{lstm_classifier_forward.1} parent=0 // pred_check_branch
    %22 = sbr.rel (0) target = $region25
  $region24: #{lstm_classifier_forward.1} parent=0 // pred_region
    _
  $region25: #{lstm_classifier_forward.1} parent=0 // pred_fallthru
    _
  %v24 = vld [vmem:[%s0] sm:$0xff]
  %v25 = vld [vmem:[%s0 + $0x8] sm:$0xff]
  %v26 = vld [vmem:[%s0 + $0x10] sm:$0xff]
  %v27 = vld [vmem:[%s0 + $0x18] sm:$0xff]
  %v28 = vld [vmem:[%s0 + $0x20] sm:$0xff]
  %v29 = vld [vmem:[%s0 + $0x28] sm:$0xff]
  %v30 = vld [vmem:[%s0 + $0x30] sm:$0xff]
  %v31 = vld [vmem:[%s0 + $0x38] sm:$0xff]
  %v32 = vlaneseq
  %v33 = vand.u32 %v32, 127
  %34 = vset.pattern.permute.xlu0 0
  %35 = vperm.xlu0 %34, %v24
  %v36 = vpop.permute.xlu0 %35
  %37 = vset.pattern.permute.xlu0 0
  %38 = vperm.xlu0 %37, %v25
  %v39 = vpop.permute.xlu0 %38
  %40 = vset.pattern.permute.xlu0 0
  %41 = vperm.xlu0 %40, %v26
  %v42 = vpop.permute.xlu0 %41
  %43 = vset.pattern.permute.xlu0 0
  %44 = vperm.xlu0 %43, %v27
  %v45 = vpop.permute.xlu0 %44
  %46 = vset.pattern.permute.xlu0 0
  %47 = vperm.xlu0 %46, %v28
  %v48 = vpop.permute.xlu0 %47
  %49 = vset.pattern.permute.xlu0 0
  %50 = vperm.xlu0 %49, %v29
  %v51 = vpop.permute.xlu0 %50
  %52 = vset.pattern.permute.xlu0 0
  %53 = vperm.xlu0 %52, %v30
  %v54 = vpop.permute.xlu0 %53
  %55 = vset.pattern.permute.xlu0 0
  %56 = vperm.xlu0 %55, %v31
  %v57 = vpop.permute.xlu0 %56
  %vm58 = vcmp.eq.s32.totalorder %v33, %v36
  %vm59 = vcmp.eq.s32.totalorder %v33, %v39
  %vm60 = vcmp.eq.s32.totalorder %v33, %v42
  %vm61 = vcmp.eq.s32.totalorder %v33, %v45
  %vm62 = vcmp.eq.s32.totalorder %v33, %v48
  %vm63 = vcmp.eq.s32.totalorder %v33, %v51
  %vm64 = vcmp.eq.s32.totalorder %v33, %v54
  %vm65 = vcmp.eq.s32.totalorder %v33, %v57
  %v66 = vsel %vm58, 1.0, 0.0
  %v67 = vsel %vm59, 1.0, 0.0
  %v68 = vsel %vm60, 1.0, 0.0
  %v69 = vsel %vm61, 1.0, 0.0
  %v70 = vsel %vm62, 1.0, 0.0
  %v71 = vsel %vm63, 1.0, 0.0
  %v72 = vsel %vm64, 1.0, 0.0
  %v73 = vsel %vm65, 1.0, 0.0
  %v74 = vpack.c.bf16 %v67, %v66
  %v75 = vpack.c.bf16 %v69, %v68
  %v76 = vpack.c.bf16 %v71, %v70
  %v77 = vpack.c.bf16 %v73, %v72
  %v78 = vld [vmem:[%s1] sm:$0xff]
  %v79 = vld [vmem:[%s1 + $0x8] sm:$0xff]
  %v80 = vld [vmem:[%s1 + $0x10] sm:$0xff]
  %v81 = vld [vmem:[%s1 + $0x18] sm:$0xff]
  %v82 = vld [vmem:[%s1 + $0x20] sm:$0xff]
  %v83 = vld [vmem:[%s1 + $0x28] sm:$0xff]
  %v84 = vld [vmem:[%s1 + $0x30] sm:$0xff]
  %v85 = vld [vmem:[%s1 + $0x38] sm:$0xff]
  %v86 = vld [vmem:[%s1 + $0x40] sm:$0xff]
  %v87 = vld [vmem:[%s1 + $0x48] sm:$0xff]
  %v88 = vld [vmem:[%s1 + $0x50] sm:$0xff]
  %v89 = vld [vmem:[%s1 + $0x58] sm:$0xff]
  %v90 = vld [vmem:[%s1 + $0x60] sm:$0xff]
  %v91 = vld [vmem:[%s1 + $0x68] sm:$0xff]
  %v92 = vld [vmem:[%s1 + $0x70] sm:$0xff]
  %v93 = vld [vmem:[%s1 + $0x78] sm:$0xff]
  %v94 = vld [vmem:[%s2] sm:$0x3]
  %v96 = vlaneseq
  %v97 = vshrl.u32 %v96, 7
  %v98 = vsub.s32 0, %v97
  %v99 = vrot.slane %v94, %v98
  %v100 = vlaneseq
  %v101 = vshrl.u32 %v100, 7
  %v102 = vsub.s32 1, %v101
  %v103 = vrot.slane %v94, %v102
  %v122 = vunpack.c.l.b16 %v78
  %v123 = vunpack.c.h.b16 %v78
  %v124 = vunpack.c.l.b16 %v79
  %v125 = vunpack.c.h.b16 %v79
  %v126 = vunpack.c.l.b16 %v80
  %v127 = vunpack.c.h.b16 %v80
  %v128 = vunpack.c.l.b16 %v81
  %v129 = vunpack.c.h.b16 %v81
  %v130 = vunpack.c.l.b16 %v82
  %v131 = vunpack.c.h.b16 %v82
  %v132 = vunpack.c.l.b16 %v83
  %v133 = vunpack.c.h.b16 %v83
  %v134 = vunpack.c.l.b16 %v84
  %v135 = vunpack.c.h.b16 %v84
  %v136 = vunpack.c.l.b16 %v85
  %v137 = vunpack.c.h.b16 %v85
  %v138 = vunpack.c.l.b16 %v86
  %v139 = vunpack.c.h.b16 %v86
  %v140 = vunpack.c.l.b16 %v87
  %v141 = vunpack.c.h.b16 %v87
  %v142 = vunpack.c.l.b16 %v88
  %v143 = vunpack.c.h.b16 %v88
  %v144 = vunpack.c.l.b16 %v89
  %v145 = vunpack.c.h.b16 %v89
  %v146 = vunpack.c.l.b16 %v90
  %v147 = vunpack.c.h.b16 %v90
  %v148 = vunpack.c.l.b16 %v91
  %v149 = vunpack.c.h.b16 %v91
  %v150 = vunpack.c.l.b16 %v92
  %v151 = vunpack.c.h.b16 %v92
  %v152 = vunpack.c.l.b16 %v93
  %v153 = vunpack.c.h.b16 %v93
  %v154 = vpack.c.b16 %v124, %v122
  %v155 = vpack.c.b16 %v125, %v123
  %v156 = vpack.c.b16 %v128, %v126
  %v157 = vpack.c.b16 %v129, %v127
  %v158 = vpack.c.b16 %v132, %v130
  %v159 = vpack.c.b16 %v133, %v131
  %v160 = vpack.c.b16 %v136, %v134
  %v161 = vpack.c.b16 %v137, %v135
  %v162 = vpack.c.b16 %v140, %v138
  %v163 = vpack.c.b16 %v141, %v139
  %v164 = vpack.c.b16 %v144, %v142
  %v165 = vpack.c.b16 %v145, %v143
  %v166 = vpack.c.b16 %v148, %v146
  %v167 = vpack.c.b16 %v149, %v147
  %v168 = vpack.c.b16 %v152, %v150
  %v169 = vpack.c.b16 %v153, %v151
  %186 = vmatprep.subr.bf16.mxu0 %v155
  %187 = vmatpush1.bf16.msra.mxu0 %v154
  %188 = vmatprep.subr.bf16.mxu0 %v157
  %189 = vmatpush1.bf16.msra.mxu0 %v156
  %190 = vmatprep.subr.bf16.mxu0 %v159
  %191 = vmatpush1.bf16.msra.mxu0 %v158
  %192 = vmatprep.subr.bf16.mxu0 %v161
  %193 = vmatpush1.bf16.msra.mxu0 %v160
  %194 = vmatprep.subr.bf16.mxu0 %v163
  %195 = vmatpush1.bf16.msra.mxu0 %v162
  %196 = vmatprep.subr.bf16.mxu0 %v165
  %197 = vmatpush1.bf16.msra.mxu0 %v164
  %198 = vmatprep.subr.bf16.mxu0 %v167
  %199 = vmatpush1.bf16.msra.mxu0 %v166
  %200 = vmatprep.subr.bf16.mxu0 %v169
  %201 = vmatpush1.bf16.msra.mxu0 %v168
  %202 = vmatprep.subr.bf16.mxu0 0
  %203 = vmatpush1.bf16.msra.mxu0 0
  %204 = vmatprep.subr.bf16.mxu0 0
  %205 = vmatpush1.bf16.msra.mxu0 0
  %206 = vmatprep.subr.bf16.mxu0 0
  %207 = vmatpush1.bf16.msra.mxu0 0
  %208 = vmatprep.subr.bf16.mxu0 0
  %209 = vmatpush1.bf16.msra.mxu0 0
  %210 = vmatprep.subr.bf16.mxu0 0
  %211 = vmatpush1.bf16.msra.mxu0 0
  %212 = vmatprep.subr.bf16.mxu0 0
  %213 = vmatpush1.bf16.msra.mxu0 0
  %214 = vmatprep.subr.bf16.mxu0 0
  %215 = vmatpush1.bf16.msra.mxu0 0
  %216 = vmatprep.subr.bf16.mxu0 0
  %217 = vmatpush1.bf16.msra.mxu0 0
  %218 = vmatprep.mubr.bf16.mxu0 0
  %219 = vmatmul.mubr.bf16.gmra.mrb[0].mxu0 %v74
  %v220 = vpop.f32.mrb[0].mxu0
  %v221 = vadd.f32 %v99, %v220
  %v222 = vpop.f32.mrb[0].mxu0
  %v223 = vadd.f32 %v103, %v222
  %v224 = vpop.f32.mrb[0].mxu0
  %v225 = vadd.f32 %v99, %v224
  %v226 = vpop.f32.mrb[0].mxu0
  %v227 = vadd.f32 %v103, %v226
  %228 = vmatprep.mubr.bf16.mxu0 0
  %229 = vmatmul.mubr.bf16.gmra.mrb[0].mxu0 %v75
  %v230 = vpop.f32.mrb[0].mxu0
  %v231 = vadd.f32 %v99, %v230
  %v232 = vpop.f32.mrb[0].mxu0
  %v233 = vadd.f32 %v103, %v232
  %v234 = vpop.f32.mrb[0].mxu0
  %v235 = vadd.f32 %v99, %v234
  %v236 = vpop.f32.mrb[0].mxu0
  %v237 = vadd.f32 %v103, %v236
  %238 = vmatprep.mubr.bf16.mxu0 0
  %239 = vmatmul.mubr.bf16.gmra.mrb[0].mxu0 %v76
  %v240 = vpop.f32.mrb[0].mxu0
  %v241 = vadd.f32 %v99, %v240
  %v242 = vpop.f32.mrb[0].mxu0
  %v243 = vadd.f32 %v103, %v242
  %v244 = vpop.f32.mrb[0].mxu0
  %v245 = vadd.f32 %v99, %v244
  %v246 = vpop.f32.mrb[0].mxu0
  %v247 = vadd.f32 %v103, %v246
  %248 = vmatprep.mubr.bf16.mxu0 0
  %249 = vmatmul.mubr.bf16.gmra.mrb[0].mxu0 %v77
  %v250 = vpop.f32.mrb[0].mxu0
  %v251 = vadd.f32 %v99, %v250
  %v252 = vpop.f32.mrb[0].mxu0
  %v253 = vadd.f32 %v103, %v252
  %v254 = vpop.f32.mrb[0].mxu0
  %v255 = vadd.f32 %v99, %v254
  %v256 = vpop.f32.mrb[0].mxu0
  %v257 = vadd.f32 %v103, %v256
  %258 = vdwg.mxu0
  %259 = vst [vmem:[#allocation2] sm:$0xff] %v221
  %260 = vst [vmem:[#allocation2 + $0x8] sm:$0xff] %v223
  %261 = vst [vmem:[#allocation2 + $0x10] sm:$0xff] %v225
  %262 = vst [vmem:[#allocation2 + $0x18] sm:$0xff] %v227
  %263 = vst [vmem:[#allocation2 + $0x20] sm:$0xff] %v231
  %264 = vst [vmem:[#allocation2 + $0x28] sm:$0xff] %v233
  %265 = vst [vmem:[#allocation2 + $0x30] sm:$0xff] %v235
  %266 = vst [vmem:[#allocation2 + $0x38] sm:$0xff] %v237
  %267 = vst [vmem:[#allocation2 + $0x40] sm:$0xff] %v241
  %268 = vst [vmem:[#allocation2 + $0x48] sm:$0xff] %v243
  %269 = vst [vmem:[#allocation2 + $0x50] sm:$0xff] %v245
  %270 = vst [vmem:[#allocation2 + $0x58] sm:$0xff] %v247
  %271 = vst [vmem:[#allocation2 + $0x60] sm:$0xff] %v251
  %272 = vst [vmem:[#allocation2 + $0x68] sm:$0xff] %v253
  %273 = vst [vmem:[#allocation2 + $0x70] sm:$0xff] %v255
  %274 = vst [vmem:[#allocation2 + $0x78] sm:$0xff] %v257
  %v275 = vld [vmem:[#allocation2 + $0x78] sm:$0xff]
  %v276 = vxor.u32 %v275, 2147483648
  %v277 = vmul.f32 %v276, 1.442695
  %v278 = vpow.pop %v277
  %v279 = vadd.f32 %v278, 1.0
  %v280 = vrcp.pop %v279
  %v281 = vmul.f32 1.0, %v280
  %v282 = vtanh.pop %v275
  %284 = vrot.lane.b32.xlu0 %v282, 64
  %v285 = vpop.permute.xlu0 %284
  %v287 = vmul.f32 %v281, %v285
  %v288 = vtanh.pop %v287
  %290 = vrot.lane.b32.xlu0 %v288, 96
  %v291 = vpop.permute.xlu0 %290
  %v293 = vmul.f32 %v281, %v291
  %v294 = vld [vmem:[%s3] sm:$0xf]
  %v295 = vld [vmem:[%s3 + $0x4] sm:$0xf]
  %v296 = vld [vmem:[%s3 + $0x8] sm:$0xf]
  %v297 = vld [vmem:[%s3 + $0xc] sm:$0xf]
  %s298 = smul.u32 0, 2
  %s299 = smul.addr %s298, 8
  %s300 = scalar_lea.vmem [#allocation2], %s299
  %v301 = vld [vmem:[%s300] sm:$0xff]
  %v306 = vunpack.c.l.b16 %v294
  %v307 = vunpack.c.l.b16 %v295
  %v308 = vunpack.c.l.b16 %v296
  %v309 = vunpack.c.l.b16 %v297
  %v310 = vpack.c.b16 %v307, %v306
  %v311 = vpack.c.b16 %v309, %v308
  %vm314 = vcmask 261120
  %v316 = vsel %vm314, 0, 0
  %318 = vmatprep.subr.bf16.mxu0 0
  %319 = vmatpush1.bf16.msra.mxu0 %v310
  %320 = vmatprep.subr.bf16.mxu0 0
  %321 = vmatpush1.bf16.msra.mxu0 %v311
  %322 = vmatprep.subr.bf16.mxu0 0
  %323 = vmatpush1.bf16.msra.mxu0 0
  %324 = vmatprep.subr.bf16.mxu0 0
  %325 = vmatpush1.bf16.msra.mxu0 0
  %326 = vmatprep.subr.bf16.mxu0 0
  %327 = vmatpush1.bf16.msra.mxu0 0
  %328 = vmatprep.subr.bf16.mxu0 0
  %329 = vmatpush1.bf16.msra.mxu0 0
  %330 = vmatprep.subr.bf16.mxu0 0
  %331 = vmatpush1.bf16.msra.mxu0 0
  %332 = vmatprep.subr.bf16.mxu0 0
  %333 = vmatpush1.bf16.msra.mxu0 0
  %334 = vmatprep.subr.bf16.mxu0 0
  %335 = vmatpush1.bf16.msra.mxu0 0
  %336 = vmatprep.subr.bf16.mxu0 0
  %337 = vmatpush1.bf16.msra.mxu0 0
  %338 = vmatprep.subr.bf16.mxu0 0
  %339 = vmatpush1.bf16.msra.mxu0 0
  %340 = vmatprep.subr.bf16.mxu0 0
  %341 = vmatpush1.bf16.msra.mxu0 0
  %342 = vmatprep.subr.bf16.mxu0 0
  %343 = vmatpush1.bf16.msra.mxu0 0
  %344 = vmatprep.subr.bf16.mxu0 0
  %345 = vmatpush1.bf16.msra.mxu0 0
  %346 = vmatprep.subr.bf16.mxu0 0
  %347 = vmatpush1.bf16.msra.mxu0 0
  %348 = vmatprep.subr.bf16.mxu0 0
  %349 = vmatpush1.bf16.msra.mxu0 0
  %350 = vmatprep.mubr.bf16.mxu0 0
  %351 = vmatmul.mubr.bf16.gmra.mrb[0].mxu0 %v316
  %v352 = vpop.f32.mrb[0].mxu0
  %v353 = vadd.f32 0.0, %v352
  %v354 = vpop.f32.mrb[0].mxu0
  %v355 = vpop.f32.mrb[0].mxu0
  %v356 = vpop.f32.mrb[0].mxu0
  %357 = vdwg.mxu0
  %v358 = vadd.f32 %v301, %v353
  %v359 = vxor.u32 %v358, 2147483648
  %v360 = vmul.f32 %v359, 1.442695
  %v361 = vpow.pop %v360
  %v362 = vadd.f32 %v361, 1.0
  %v363 = vrcp.pop %v362
  %v364 = vmul.f32 1.0, %v363
  %v365 = vtanh.pop %v358
  %v366 = vmul.f32 %v364, 0.0
  %368 = vrot.lane.b32.xlu0 %v365, 64
  %v369 = vpop.permute.xlu0 %368
  %v371 = vmul.f32 %v364, %v369
  %373 = vrot.lane.b32.xlu0 %v371, 32
  %v374 = vpop.permute.xlu0 %373
  %v376 = vadd.f32 %v366, %v374
  %v377 = vtanh.pop %v376
  %379 = vrot.lane.b32.xlu0 %v377, 64
  %v380 = vpop.permute.xlu0 %379
  %v382 = vmul.f32 %v364, %v380
  %s383 = smul.u32 1, 2
  %s384 = smul.addr %s383, 8
  %s385 = scalar_lea.vmem [#allocation2], %s384
  %v386 = vld [vmem:[%s385] sm:$0xff]
  %v387 = vpack.c.bf16 %v382, %v382
  %389 = vrot.lane.b32.xlu0 %v387, 32
  %v390 = vpop.permute.xlu0 %389
  %v392 = vsel %vm314, %v390, 0
  %394 = vmatprep.subr.bf16.mxu0 0
  %395 = vmatpush1.bf16.msra.mxu0 %v310
  %396 = vmatprep.subr.bf16.mxu0 0
  %397 = vmatpush1.bf16.msra.mxu0 %v311
  %398 = vmatprep.subr.bf16.mxu0 0
  %399 = vmatpush1.bf16.msra.mxu0 0
  %400 = vmatprep.subr.bf16.mxu0 0
  %401 = vmatpush1.bf16.msra.mxu0 0
  %402 = vmatprep.subr.bf16.mxu0 0
  %403 = vmatpush1.bf16.msra.mxu0 0
  %404 = vmatprep.subr.bf16.mxu0 0
  %405 = vmatpush1.bf16.msra.mxu0 0
  %406 = vmatprep.subr.bf16.mxu0 0
  %407 = vmatpush1.bf16.msra.mxu0 0
  %408 = vmatprep.subr.bf16.mxu0 0
  %409 = vmatpush1.bf16.msra.mxu0 0
  %410 = vmatprep.subr.bf16.mxu0 0
  %411 = vmatpush1.bf16.msra.mxu0 0
  %412 = vmatprep.subr.bf16.mxu0 0
  %413 = vmatpush1.bf16.msra.mxu0 0
  %414 = vmatprep.subr.bf16.mxu0 0
  %415 = vmatpush1.bf16.msra.mxu0 0
  %416 = vmatprep.subr.bf16.mxu0 0
  %417 = vmatpush1.bf16.msra.mxu0 0
  %418 = vmatprep.subr.bf16.mxu0 0
  %419 = vmatpush1.bf16.msra.mxu0 0
  %420 = vmatprep.subr.bf16.mxu0 0
  %421 = vmatpush1.bf16.msra.mxu0 0
  %422 = vmatprep.subr.bf16.mxu0 0
  %423 = vmatpush1.bf16.msra.mxu0 0
  %424 = vmatprep.subr.bf16.mxu0 0
  %425 = vmatpush1.bf16.msra.mxu0 0
  %426 = vmatprep.mubr.bf16.mxu0 0
  %427 = vmatmul.mubr.bf16.gmra.mrb[0].mxu0 %v392
  %v428 = vpop.f32.mrb[0].mxu0
  %v429 = vadd.f32 0.0, %v428
  %v430 = vpop.f32.mrb[0].mxu0
  %v431 = vpop.f32.mrb[0].mxu0
  %v432 = vpop.f32.mrb[0].mxu0
  %433 = vdwg.mxu0
  %v434 = vadd.f32 %v386, %v429
  %v435 = vxor.u32 %v434, 2147483648
  %v436 = vmul.f32 %v435, 1.442695
  %v437 = vpow.pop %v436
  %v438 = vadd.f32 %v437, 1.0
  %v439 = vrcp.pop %v438
  %v440 = vmul.f32 1.0, %v439
  %v441 = vtanh.pop %v434
  %v442 = vmul.f32 %v440, %v376
  %444 = vrot.lane.b32.xlu0 %v441, 64
  %v445 = vpop.permute.xlu0 %444
  %v447 = vmul.f32 %v440, %v445
  %449 = vrot.lane.b32.xlu0 %v447, 32
  %v450 = vpop.permute.xlu0 %449
  %v452 = vadd.f32 %v442, %v450
  %v453 = vtanh.pop %v452
  %455 = vrot.lane.b32.xlu0 %v453, 64
  %v456 = vpop.permute.xlu0 %455
  %v458 = vmul.f32 %v440, %v456
  %s459 = smul.u32 2, 2
  %s460 = smul.addr %s459, 8
  %s461 = scalar_lea.vmem [#allocation2], %s460
  %v462 = vld [vmem:[%s461] sm:$0xff]
  %v463 = vpack.c.bf16 %v458, %v458
  %465 = vrot.lane.b32.xlu0 %v463, 32
  %v466 = vpop.permute.xlu0 %465
  %v468 = vsel %vm314, %v466, 0
  %470 = vmatprep.subr.bf16.mxu0 0
  %471 = vmatpush1.bf16.msra.mxu0 %v310
  %472 = vmatprep.subr.bf16.mxu0 0
  %473 = vmatpush1.bf16.msra.mxu0 %v311
  %474 = vmatprep.subr.bf16.mxu0 0
  %475 = vmatpush1.bf16.msra.mxu0 0
  %476 = vmatprep.subr.bf16.mxu0 0
  %477 = vmatpush1.bf16.msra.mxu0 0
  %478 = vmatprep.subr.bf16.mxu0 0
  %479 = vmatpush1.bf16.msra.mxu0 0
  %480 = vmatprep.subr.bf16.mxu0 0
  %481 = vmatpush1.bf16.msra.mxu0 0
  %482 = vmatprep.subr.bf16.mxu0 0
  %483 = vmatpush1.bf16.msra.mxu0 0
  %484 = vmatprep.subr.bf16.mxu0 0
  %485 = vmatpush1.bf16.msra.mxu0 0
  %486 = vmatprep.subr.bf16.mxu0 0
  %487 = vmatpush1.bf16.msra.mxu0 0
  %488 = vmatprep.subr.bf16.mxu0 0
  %489 = vmatpush1.bf16.msra.mxu0 0
  %490 = vmatprep.subr.bf16.mxu0 0
  %491 = vmatpush1.bf16.msra.mxu0 0
  %492 = vmatprep.subr.bf16.mxu0 0
  %493 = vmatpush1.bf16.msra.mxu0 0
  %494 = vmatprep.subr.bf16.mxu0 0
  %495 = vmatpush1.bf16.msra.mxu0 0
  %496 = vmatprep.subr.bf16.mxu0 0
  %497 = vmatpush1.bf16.msra.mxu0 0
  %498 = vmatprep.subr.bf16.mxu0 0
  %499 = vmatpush1.bf16.msra.mxu0 0
  %500 = vmatprep.subr.bf16.mxu0 0
  %501 = vmatpush1.bf16.msra.mxu0 0
  %502 = vmatprep.mubr.bf16.mxu0 0
  %503 = vmatmul.mubr.bf16.gmra.mrb[0].mxu0 %v468
  %v504 = vpop.f32.mrb[0].mxu0
  %v505 = vadd.f32 0.0, %v504
  %v506 = vpop.f32.mrb[0].mxu0
  %v507 = vpop.f32.mrb[0].mxu0
  %v508 = vpop.f32.mrb[0].mxu0
  %509 = vdwg.mxu0
  %v510 = vadd.f32 %v462, %v505
  %v511 = vxor.u32 %v510, 2147483648
  %v512 = vmul.f32 %v511, 1.442695
  %v513 = vpow.pop %v512
  %v514 = vadd.f32 %v513, 1.0
  %v515 = vrcp.pop %v514
  %v516 = vmul.f32 1.0, %v515
  %v517 = vtanh.pop %v510
  %v518 = vmul.f32 %v516, %v452
  %520 = vrot.lane.b32.xlu0 %v517, 64
  %v521 = vpop.permute.xlu0 %520
  %v523 = vmul.f32 %v516, %v521
  %525 = vrot.lane.b32.xlu0 %v523, 32
  %v526 = vpop.permute.xlu0 %525
  %v528 = vadd.f32 %v518, %v526
  %v529 = vtanh.pop %v528
  %531 = vrot.lane.b32.xlu0 %v529, 64
  %v532 = vpop.permute.xlu0 %531
  %v534 = vmul.f32 %v516, %v532
  %s535 = smul.u32 3, 2
  %s536 = smul.addr %s535, 8
  %s537 = scalar_lea.vmem [#allocation2], %s536
  %v538 = vld [vmem:[%s537] sm:$0xff]
  %v539 = vpack.c.bf16 %v534, %v534
  %541 = vrot.lane.b32.xlu0 %v539, 32
  %v542 = vpop.permute.xlu0 %541
  %v544 = vsel %vm314, %v542, 0
  %546 = vmatprep.subr.bf16.mxu0 0
  %547 = vmatpush1.bf16.msra.mxu0 %v310
  %548 = vmatprep.subr.bf16.mxu0 0
  %549 = vmatpush1.bf16.msra.mxu0 %v311
  %550 = vmatprep.subr.bf16.mxu0 0
  %551 = vmatpush1.bf16.msra.mxu0 0
  %552 = vmatprep.subr.bf16.mxu0 0
  %553 = vmatpush1.bf16.msra.mxu0 0
  %554 = vmatprep.subr.bf16.mxu0 0
  %555 = vmatpush1.bf16.msra.mxu0 0
  %556 = vmatprep.subr.bf16.mxu0 0
  %557 = vmatpush1.bf16.msra.mxu0 0
  %558 = vmatprep.subr.bf16.mxu0 0
  %559 = vmatpush1.bf16.msra.mxu0 0
  %560 = vmatprep.subr.bf16.mxu0 0
  %561 = vmatpush1.bf16.msra.mxu0 0
  %562 = vmatprep.subr.bf16.mxu0 0
  %563 = vmatpush1.bf16.msra.mxu0 0
  %564 = vmatprep.subr.bf16.mxu0 0
  %565 = vmatpush1.bf16.msra.mxu0 0
  %566 = vmatprep.subr.bf16.mxu0 0
  %567 = vmatpush1.bf16.msra.mxu0 0
  %568 = vmatprep.subr.bf16.mxu0 0
  %569 = vmatpush1.bf16.msra.mxu0 0
  %570 = vmatprep.subr.bf16.mxu0 0
  %571 = vmatpush1.bf16.msra.mxu0 0
  %572 = vmatprep.subr.bf16.mxu0 0
  %573 = vmatpush1.bf16.msra.mxu0 0
  %574 = vmatprep.subr.bf16.mxu0 0
  %575 = vmatpush1.bf16.msra.mxu0 0
  %576 = vmatprep.subr.bf16.mxu0 0
  %577 = vmatpush1.bf16.msra.mxu0 0
  %578 = vmatprep.mubr.bf16.mxu0 0
  %579 = vmatmul.mubr.bf16.gmra.mrb[0].mxu0 %v544
  %v580 = vpop.f32.mrb[0].mxu0
  %v581 = vadd.f32 0.0, %v580
  %v582 = vpop.f32.mrb[0].mxu0
  %v583 = vpop.f32.mrb[0].mxu0
  %v584 = vpop.f32.mrb[0].mxu0
  %585 = vdwg.mxu0
  %v586 = vadd.f32 %v538, %v581
  %v587 = vxor.u32 %v586, 2147483648
  %v588 = vmul.f32 %v587, 1.442695
  %v589 = vpow.pop %v588
  %v590 = vadd.f32 %v589, 1.0
  %v591 = vrcp.pop %v590
  %v592 = vmul.f32 1.0, %v591
  %v593 = vtanh.pop %v586
  %v594 = vmul.f32 %v592, %v528
  %596 = vrot.lane.b32.xlu0 %v593, 64
  %v597 = vpop.permute.xlu0 %596
  %v599 = vmul.f32 %v592, %v597
  %601 = vrot.lane.b32.xlu0 %v599, 32
  %v602 = vpop.permute.xlu0 %601
  %v604 = vadd.f32 %v594, %v602
  %v605 = vtanh.pop %v604
  %607 = vrot.lane.b32.xlu0 %v605, 64
  %v608 = vpop.permute.xlu0 %607
  %v610 = vmul.f32 %v592, %v608
  %s611 = smul.u32 4, 2
  %s612 = smul.addr %s611, 8
  %s613 = scalar_lea.vmem [#allocation2], %s612
  %v614 = vld [vmem:[%s613] sm:$0xff]
  %v615 = vpack.c.bf16 %v610, %v610
  %617 = vrot.lane.b32.xlu0 %v615, 32
  %v618 = vpop.permute.xlu0 %617
  %v620 = vsel %vm314, %v618, 0
  %622 = vmatprep.subr.bf16.mxu0 0
  %623 = vmatpush1.bf16.msra.mxu0 %v310
  %624 = vmatprep.subr.bf16.mxu0 0
  %625 = vmatpush1.bf16.msra.mxu0 %v311
  %626 = vmatprep.subr.bf16.mxu0 0
  %627 = vmatpush1.bf16.msra.mxu0 0
  %628 = vmatprep.subr.bf16.mxu0 0
  %629 = vmatpush1.bf16.msra.mxu0 0
  %630 = vmatprep.subr.bf16.mxu0 0
  %631 = vmatpush1.bf16.msra.mxu0 0
  %632 = vmatprep.subr.bf16.mxu0 0
  %633 = vmatpush1.bf16.msra.mxu0 0
  %634 = vmatprep.subr.bf16.mxu0 0
  %635 = vmatpush1.bf16.msra.mxu0 0
  %636 = vmatprep.subr.bf16.mxu0 0
  %637 = vmatpush1.bf16.msra.mxu0 0
  %638 = vmatprep.subr.bf16.mxu0 0
  %639 = vmatpush1.bf16.msra.mxu0 0
  %640 = vmatprep.subr.bf16.mxu0 0
  %641 = vmatpush1.bf16.msra.mxu0 0
  %642 = vmatprep.subr.bf16.mxu0 0
  %643 = vmatpush1.bf16.msra.mxu0 0
  %644 = vmatprep.subr.bf16.mxu0 0
  %645 = vmatpush1.bf16.msra.mxu0 0
  %646 = vmatprep.subr.bf16.mxu0 0
  %647 = vmatpush1.bf16.msra.mxu0 0
  %648 = vmatprep.subr.bf16.mxu0 0
  %649 = vmatpush1.bf16.msra.mxu0 0
  %650 = vmatprep.subr.bf16.mxu0 0
  %651 = vmatpush1.bf16.msra.mxu0 0
  %652 = vmatprep.subr.bf16.mxu0 0
  %653 = vmatpush1.bf16.msra.mxu0 0
  %654 = vmatprep.mubr.bf16.mxu0 0
  %655 = vmatmul.mubr.bf16.gmra.mrb[0].mxu0 %v620
  %v656 = vpop.f32.mrb[0].mxu0
  %v657 = vadd.f32 0.0, %v656
  %v658 = vpop.f32.mrb[0].mxu0
  %v659 = vpop.f32.mrb[0].mxu0
  %v660 = vpop.f32.mrb[0].mxu0
  %661 = vdwg.mxu0
  %v662 = vadd.f32 %v614, %v657
  %v663 = vxor.u32 %v662, 2147483648
  %v664 = vmul.f32 %v663, 1.442695
  %v665 = vpow.pop %v664
  %v666 = vadd.f32 %v665, 1.0
  %v667 = vrcp.pop %v666
  %v668 = vmul.f32 1.0, %v667
  %v669 = vtanh.pop %v662
  %v670 = vmul.f32 %v668, %v604
  %672 = vrot.lane.b32.xlu0 %v669, 64
  %v673 = vpop.permute.xlu0 %672
  %v675 = vmul.f32 %v668, %v673
  %677 = vrot.lane.b32.xlu0 %v675, 32
  %v678 = vpop.permute.xlu0 %677
  %v680 = vadd.f32 %v670, %v678
  %v681 = vtanh.pop %v680
  %683 = vrot.lane.b32.xlu0 %v681, 64
  %v684 = vpop.permute.xlu0 %683
  %v686 = vmul.f32 %v668, %v684
  %s687 = smul.u32 5, 2
  %s688 = smul.addr %s687, 8
  %s689 = scalar_lea.vmem [#allocation2], %s688
  %v690 = vld [vmem:[%s689] sm:$0xff]
  %v691 = vpack.c.bf16 %v686, %v686
  %693 = vrot.lane.b32.xlu0 %v691, 32
  %v694 = vpop.permute.xlu0 %693
  %v696 = vsel %vm314, %v694, 0
  %698 = vmatprep.subr.bf16.mxu0 0
  %699 = vmatpush1.bf16.msra.mxu0 %v310
  %700 = vmatprep.subr.bf16.mxu0 0
  %701 = vmatpush1.bf16.msra.mxu0 %v311
  %702 = vmatprep.subr.bf16.mxu0 0
  %703 = vmatpush1.bf16.msra.mxu0 0
  %704 = vmatprep.subr.bf16.mxu0 0
  %705 = vmatpush1.bf16.msra.mxu0 0
  %706 = vmatprep.subr.bf16.mxu0 0
  %707 = vmatpush1.bf16.msra.mxu0 0
  %708 = vmatprep.subr.bf16.mxu0 0
  %709 = vmatpush1.bf16.msra.mxu0 0
  %710 = vmatprep.subr.bf16.mxu0 0
  %711 = vmatpush1.bf16.msra.mxu0 0
  %712 = vmatprep.subr.bf16.mxu0 0
  %713 = vmatpush1.bf16.msra.mxu0 0
  %714 = vmatprep.subr.bf16.mxu0 0
  %715 = vmatpush1.bf16.msra.mxu0 0
  %716 = vmatprep.subr.bf16.mxu0 0
  %717 = vmatpush1.bf16.msra.mxu0 0
  %718 = vmatprep.subr.bf16.mxu0 0
  %719 = vmatpush1.bf16.msra.mxu0 0
  %720 = vmatprep.subr.bf16.mxu0 0
  %721 = vmatpush1.bf16.msra.mxu0 0
  %722 = vmatprep.subr.bf16.mxu0 0
  %723 = vmatpush1.bf16.msra.mxu0 0
  %724 = vmatprep.subr.bf16.mxu0 0
  %725 = vmatpush1.bf16.msra.mxu0 0
  %726 = vmatprep.subr.bf16.mxu0 0
  %727 = vmatpush1.bf16.msra.mxu0 0
  %728 = vmatprep.subr.bf16.mxu0 0
  %729 = vmatpush1.bf16.msra.mxu0 0
  %730 = vmatprep.mubr.bf16.mxu0 0
  %731 = vmatmul.mubr.bf16.gmra.mrb[0].mxu0 %v696
  %v732 = vpop.f32.mrb[0].mxu0
  %v733 = vadd.f32 0.0, %v732
  %v734 = vpop.f32.mrb[0].mxu0
  %v735 = vpop.f32.mrb[0].mxu0
  %v736 = vpop.f32.mrb[0].mxu0
  %737 = vdwg.mxu0
  %v738 = vadd.f32 %v690, %v733
  %v739 = vxor.u32 %v738, 2147483648
  %v740 = vmul.f32 %v739, 1.442695
  %v741 = vpow.pop %v740
  %v742 = vadd.f32 %v741, 1.0
  %v743 = vrcp.pop %v742
  %v744 = vmul.f32 1.0, %v743
  %v745 = vtanh.pop %v738
  %v746 = vmul.f32 %v744, %v680
  %748 = vrot.lane.b32.xlu0 %v745, 64
  %v749 = vpop.permute.xlu0 %748
  %v751 = vmul.f32 %v744, %v749
  %753 = vrot.lane.b32.xlu0 %v751, 32
  %v754 = vpop.permute.xlu0 %753
  %v756 = vadd.f32 %v746, %v754
  %v757 = vtanh.pop %v756
  %759 = vrot.lane.b32.xlu0 %v757, 64
  %v760 = vpop.permute.xlu0 %759
  %v762 = vmul.f32 %v744, %v760
  %s763 = smul.u32 6, 2
  %s764 = smul.addr %s763, 8
  %s765 = scalar_lea.vmem [#allocation2], %s764
  %v766 = vld [vmem:[%s765] sm:$0xff]
  %v767 = vpack.c.bf16 %v762, %v762
  %769 = vrot.lane.b32.xlu0 %v767, 32
  %v770 = vpop.permute.xlu0 %769
  %v772 = vsel %vm314, %v770, 0
  %774 = vmatprep.subr.bf16.mxu0 0
  %775 = vmatpush1.bf16.msra.mxu0 %v310
  %776 = vmatprep.subr.bf16.mxu0 0
  %777 = vmatpush1.bf16.msra.mxu0 %v311
  %778 = vmatprep.subr.bf16.mxu0 0
  %779 = vmatpush1.bf16.msra.mxu0 0
  %780 = vmatprep.subr.bf16.mxu0 0
  %781 = vmatpush1.bf16.msra.mxu0 0
  %782 = vmatprep.subr.bf16.mxu0 0
  %783 = vmatpush1.bf16.msra.mxu0 0
  %784 = vmatprep.subr.bf16.mxu0 0
  %785 = vmatpush1.bf16.msra.mxu0 0
  %786 = vmatprep.subr.bf16.mxu0 0
  %787 = vmatpush1.bf16.msra.mxu0 0
  %788 = vmatprep.subr.bf16.mxu0 0
  %789 = vmatpush1.bf16.msra.mxu0 0
  %790 = vmatprep.subr.bf16.mxu0 0
  %791 = vmatpush1.bf16.msra.mxu0 0
  %792 = vmatprep.subr.bf16.mxu0 0
  %793 = vmatpush1.bf16.msra.mxu0 0
  %794 = vmatprep.subr.bf16.mxu0 0
  %795 = vmatpush1.bf16.msra.mxu0 0
  %796 = vmatprep.subr.bf16.mxu0 0
  %797 = vmatpush1.bf16.msra.mxu0 0
  %798 = vmatprep.subr.bf16.mxu0 0
  %799 = vmatpush1.bf16.msra.mxu0 0
  %800 = vmatprep.subr.bf16.mxu0 0
  %801 = vmatpush1.bf16.msra.mxu0 0
  %802 = vmatprep.subr.bf16.mxu0 0
  %803 = vmatpush1.bf16.msra.mxu0 0
  %804 = vmatprep.subr.bf16.mxu0 0
  %805 = vmatpush1.bf16.msra.mxu0 0
  %806 = vmatprep.mubr.bf16.mxu0 0
  %807 = vmatmul.mubr.bf16.gmra.mrb[0].mxu0 %v772
  %v808 = vpop.f32.mrb[0].mxu0
  %v809 = vadd.f32 0.0, %v808
  %v810 = vpop.f32.mrb[0].mxu0
  %v811 = vpop.f32.mrb[0].mxu0
  %v812 = vpop.f32.mrb[0].mxu0
  %813 = vdwg.mxu0
  %v814 = vadd.f32 %v766, %v809
  %v815 = vxor.u32 %v814, 2147483648
  %v816 = vmul.f32 %v815, 1.442695
  %v817 = vpow.pop %v816
  %v818 = vadd.f32 %v817, 1.0
  %v819 = vrcp.pop %v818
  %v820 = vmul.f32 1.0, %v819
  %v821 = vtanh.pop %v814
  %v822 = vmul.f32 %v820, %v756
  %824 = vrot.lane.b32.xlu0 %v821, 64
  %v825 = vpop.permute.xlu0 %824
  %v827 = vmul.f32 %v820, %v825
  %829 = vrot.lane.b32.xlu0 %v827, 32
  %v830 = vpop.permute.xlu0 %829
  %v832 = vadd.f32 %v822, %v830
  %v833 = vtanh.pop %v832
  %835 = vrot.lane.b32.xlu0 %v833, 64
  %v836 = vpop.permute.xlu0 %835
  %v838 = vmul.f32 %v820, %v836
  %s839 = smul.u32 7, 2
  %s840 = smul.addr %s839, 8
  %s841 = scalar_lea.vmem [#allocation2], %s840
  %v842 = vld [vmem:[%s841] sm:$0xff]
  %v843 = vpack.c.bf16 %v838, %v838
  %845 = vrot.lane.b32.xlu0 %v843, 32
  %v846 = vpop.permute.xlu0 %845
  %v848 = vsel %vm314, %v846, 0
  %850 = vmatprep.subr.bf16.mxu0 0
  %851 = vmatpush1.bf16.msra.mxu0 %v310
  %852 = vmatprep.subr.bf16.mxu0 0
  %853 = vmatpush1.bf16.msra.mxu0 %v311
  %854 = vmatprep.subr.bf16.mxu0 0
  %855 = vmatpush1.bf16.msra.mxu0 0
  %856 = vmatprep.subr.bf16.mxu0 0
  %857 = vmatpush1.bf16.msra.mxu0 0
  %858 = vmatprep.subr.bf16.mxu0 0
  %859 = vmatpush1.bf16.msra.mxu0 0
  %860 = vmatprep.subr.bf16.mxu0 0
  %861 = vmatpush1.bf16.msra.mxu0 0
  %862 = vmatprep.subr.bf16.mxu0 0
  %863 = vmatpush1.bf16.msra.mxu0 0
  %864 = vmatprep.subr.bf16.mxu0 0
  %865 = vmatpush1.bf16.msra.mxu0 0
  %866 = vmatprep.subr.bf16.mxu0 0
  %867 = vmatpush1.bf16.msra.mxu0 0
  %868 = vmatprep.subr.bf16.mxu0 0
  %869 = vmatpush1.bf16.msra.mxu0 0
  %870 = vmatprep.subr.bf16.mxu0 0
  %871 = vmatpush1.bf16.msra.mxu0 0
  %872 = vmatprep.subr.bf16.mxu0 0
  %873 = vmatpush1.bf16.msra.mxu0 0
  %874 = vmatprep.subr.bf16.mxu0 0
  %875 = vmatpush1.bf16.msra.mxu0 0
  %876 = vmatprep.subr.bf16.mxu0 0
  %877 = vmatpush1.bf16.msra.mxu0 0
  %878 = vmatprep.subr.bf16.mxu0 0
  %879 = vmatpush1.bf16.msra.mxu0 0
  %880 = vmatprep.subr.bf16.mxu0 0
  %881 = vmatpush1.bf16.msra.mxu0 0
  %882 = vmatprep.mubr.bf16.mxu0 0
  %883 = vmatmul.mubr.bf16.gmra.mrb[0].mxu0 %v848
  %v884 = vpop.f32.mrb[0].mxu0
  %v885 = vadd.f32 0.0, %v884
  %v886 = vpop.f32.mrb[0].mxu0
  %v887 = vpop.f32.mrb[0].mxu0
  %v888 = vpop.f32.mrb[0].mxu0
  %889 = vdwg.mxu0
  %v890 = vadd.f32 %v842, %v885
  %v891 = vxor.u32 %v890, 2147483648
  %v892 = vmul.f32 %v891, 1.442695
  %v893 = vpow.pop %v892
  %v894 = vadd.f32 %v893, 1.0
  %v895 = vrcp.pop %v894
  %v896 = vmul.f32 1.0, %v895
  %v897 = vtanh.pop %v890
  %v898 = vmul.f32 %v896, %v832
  %900 = vrot.lane.b32.xlu0 %v897, 64
  %v901 = vpop.permute.xlu0 %900
  %v903 = vmul.f32 %v896, %v901
  %905 = vrot.lane.b32.xlu0 %v903, 32
  %v906 = vpop.permute.xlu0 %905
  %v908 = vadd.f32 %v898, %v906
  %v909 = vtanh.pop %v908
  %911 = vrot.lane.b32.xlu0 %v909, 64
  %v912 = vpop.permute.xlu0 %911
  %v914 = vmul.f32 %v896, %v912
  %916 = vrot.lane.b32.xlu0 %v914, 32
  %v917 = vpop.permute.xlu0 %916
  %920 = vrot.lane.b32.xlu0 %v293, 64
  %v921 = vpop.permute.xlu0 %920
  %v923 = vsel %vm314, %v917, %v921
  %v924 = vpack.c.bf16 %v923, %v923
  %v925 = vld [vmem:[%s4] sm:$0xf]
  %v926 = vld [vmem:[%s4 + $0x4] sm:$0xf]
  %v927 = vld [vmem:[%s4 + $0x8] sm:$0xf]
  %v928 = vld [vmem:[%s4 + $0xc] sm:$0xf]
  %v929 = vld [vmem:[%s4 + $0x10] sm:$0xf]
  %v930 = vld [vmem:[%s4 + $0x14] sm:$0xf]
  %v931 = vld [vmem:[%s4 + $0x18] sm:$0xf]
  %v932 = vld [vmem:[%s4 + $0x1c] sm:$0xf]
  %v933 = vld [vmem:[%s5] sm:$0x1]
  %v935 = vlaneseq
  %v936 = vshrl.u32 %v935, 7
  %v937 = vsub.s32 0, %v936
  %v938 = vrot.slane %v933, %v937
  %v948 = vunpack.c.l.b16 %v925
  %v949 = vunpack.c.l.b16 %v926
  %v950 = vunpack.c.l.b16 %v927
  %v951 = vunpack.c.l.b16 %v928
  %v952 = vunpack.c.l.b16 %v929
  %v953 = vunpack.c.l.b16 %v930
  %v954 = vunpack.c.l.b16 %v931
  %v955 = vunpack.c.l.b16 %v932
  %v956 = vpack.c.b16 %v949, %v948
  %v957 = vpack.c.b16 %v951, %v950
  %v958 = vpack.c.b16 %v953, %v952
  %v959 = vpack.c.b16 %v955, %v954
  %vm964 = vcmask 523264
  %v966 = vsel %vm964, %v924, 0
  %968 = vmatprep.subr.bf16.mxu0 0
  %969 = vmatpush1.bf16.msra.mxu0 %v956
  %970 = vmatprep.subr.bf16.mxu0 0
  %971 = vmatpush1.bf16.msra.mxu0 %v957
  %972 = vmatprep.subr.bf16.mxu0 0
  %973 = vmatpush1.bf16.msra.mxu0 %v958
  %974 = vmatprep.subr.bf16.mxu0 0
  %975 = vmatpush1.bf16.msra.mxu0 %v959
  %976 = vmatprep.subr.bf16.mxu0 0
  %977 = vmatpush1.bf16.msra.mxu0 0
  %978 = vmatprep.subr.bf16.mxu0 0
  %979 = vmatpush1.bf16.msra.mxu0 0
  %980 = vmatprep.subr.bf16.mxu0 0
  %981 = vmatpush1.bf16.msra.mxu0 0
  %982 = vmatprep.subr.bf16.mxu0 0
  %983 = vmatpush1.bf16.msra.mxu0 0
  %984 = vmatprep.subr.bf16.mxu0 0
  %985 = vmatpush1.bf16.msra.mxu0 0
  %986 = vmatprep.subr.bf16.mxu0 0
  %987 = vmatpush1.bf16.msra.mxu0 0
  %988 = vmatprep.subr.bf16.mxu0 0
  %989 = vmatpush1.bf16.msra.mxu0 0
  %990 = vmatprep.subr.bf16.mxu0 0
  %991 = vmatpush1.bf16.msra.mxu0 0
  %992 = vmatprep.subr.bf16.mxu0 0
  %993 = vmatpush1.bf16.msra.mxu0 0
  %994 = vmatprep.subr.bf16.mxu0 0
  %995 = vmatpush1.bf16.msra.mxu0 0
  %996 = vmatprep.subr.bf16.mxu0 0
  %997 = vmatpush1.bf16.msra.mxu0 0
  %998 = vmatprep.subr.bf16.mxu0 0
  %999 = vmatpush1.bf16.msra.mxu0 0
  %1000 = vmatprep.mubr.bf16.mxu0 0
  %1001 = vmatmul.mubr.bf16.gmra.mrb[0].mxu0 %v966
  %v1002 = vpop.f32.mrb[0].mxu0
  %v1003 = vadd.f32 %v938, %v1002
  %v1004 = vpop.f32.mrb[0].mxu0
  %v1005 = vpop.f32.mrb[0].mxu0
  %v1006 = vpop.f32.mrb[0].mxu0
  %1007 = vdwg.mxu0
  %1008 = vst [vmem:[%s6] sm:$0xff] %v1003
  // Predicated region
  $region26: #{lstm_classifier_forward.1} parent=0 // pred_check
    _
  $region27: #{lstm_classifier_forward.1} parent=0 // pred_check_branch
    %1010 = sbr.rel (0) target = $region29
  $region28: #{lstm_classifier_forward.1} parent=0 // pred_region
    _
  $region29: #{lstm_classifier_forward.1} parent=0 // pred_fallthru
    _
  // Predicated region
  $region30: #{lstm_classifier_forward.1} parent=0 // pred_check
    _
  $region31: #{lstm_classifier_forward.1} parent=0 // pred_check_branch
    %1012 = sbr.rel (0) target = $region33
  $region32: #{lstm_classifier_forward.1} parent=0 // pred_region
    _
  $region33: #{lstm_classifier_forward.1} parent=0 // pred_fallthru
    _

</llo_original>
